<compile_context>
chip_gen: v5e
topology: v5e:2x2
jax: 0.10.0
libtpu: 0.0.40
codegen_flags: <defaults>
</compile_context>

<pallas_src>
import jax
import jax.numpy as jnp
from jax.experimental import pallas as pl
from jax.experimental.pallas import tpu as pltpu


LN_EPS = 1e-5


def _round_up(x, m):
    return ((x + m - 1) // m) * m


def _vmem_capacity_bytes():
    """Physical per-core VMEM; conservative fallback if the query is unavailable."""
    try:
        return int(pltpu.get_tpu_info().vmem_capacity_bytes)
    except Exception:
        return 64 << 20  # v7x per-TC size; a safe lower bound for v5e/v6e as well


def _block_spec(shape, index_map, *, single_buffer=False):
    """BlockSpec, optionally single-buffered (for grid-constant operands)."""
    if single_buffer:
        try:
            return pl.BlockSpec(shape, index_map, pipeline_mode=pl.Buffered(1))
        except Exception:
            pass  # pipeline_mode not supported by this JAX version: default buffering
    return pl.BlockSpec(shape, index_map)


# ----------------------------- kernels -------------------------------------


def _layernorm_normalize(x_ref, out_dtype):
    """Per-row LayerNorm (no affine; affine is folded into the weight), f32 stats."""
    x = x_ref[...].astype(jnp.float32)
    mean = jnp.mean(x, axis=-1, keepdims=True)
    cent = x - mean
    var = jnp.mean(cent * cent, axis=-1, keepdims=True)  # biased var == PyTorch LN
    xn = cent * jax.lax.rsqrt(var + LN_EPS)
    return xn.astype(out_dtype)


def _resblock_kernel_fused(x_ref, w_ref, b_ref, o_ref):
    """Single column tile (tn == D): LN + matmul + bias in one pass.

    x_ref : (tm, D)  input rows (full feature dim -> exact LN statistics)
    w_ref : (D, tn)  folded weight  W' = diag(gamma) @ W^T   (bf16 for the MXU)
    b_ref : (1, tn)  folded bias    b' = beta @ W^T + b      (f32)
    o_ref : (tm, tn)
    """
    y = _layernorm_normalize(x_ref, w_ref.dtype)
    out = jnp.dot(y, w_ref[...], preferred_element_type=jnp.float32) + b_ref[...]
    o_ref[...] = out.astype(o_ref.dtype)


def _resblock_kernel_cached(x_ref, w_ref, b_ref, o_ref, xn_ref):
    """Multiple column tiles (tn < D): compute LN once per row tile (j == 0), cache
    the normalized bf16 activations in VMEM scratch, reuse across column tiles."""
    @pl.when(pl.program_id(1) == 0)
    def _():
        xn_ref[...] = _layernorm_normalize(x_ref, xn_ref.dtype)

    out = jnp.dot(xn_ref[...], w_ref[...], preferred_element_type=jnp.float32)
    out = out + b_ref[...]
    o_ref[...] = out.astype(o_ref.dtype)


# ----------------------------- wrapper -------------------------------------


def fold_resblock_params(gamma, beta, w_t, b, *, mxu_dtype=jnp.bfloat16):
    """Fold the LayerNorm affine into the Linear.  Call ONCE at init time.

      Linear(LN(x)) = (xn * gamma + beta) @ W^T + b
                    = xn @ (gamma[:, None] * W^T) + (beta @ W^T + b)

    gamma/beta: (D,).  w_t: (D, D) == W.T of nn.Linear(D, D).  b: (D,).
    Returns (w_fused (D, D) in mxu_dtype, b_fused (1, D) f32).
    """
    gamma_f = gamma.astype(jnp.float32)
    beta_f = beta.astype(jnp.float32)
    w_f32 = w_t.astype(jnp.float32)
    w_fused = (gamma_f[:, None] * w_f32).astype(mxu_dtype)              # (D, D)
    b_fused = (beta_f @ w_f32 + b.astype(jnp.float32)).reshape(1, -1)   # (1, D) f32
    return w_fused, b_fused


def _choose_tiles(M, D, x_isz, out_isz, mxu_isz, tm, tn):
    # Min sublane tile: 8 rows for 32-bit input dtypes, 16 for sub-32-bit (bf16).
    min_tm = 8 if x_isz >= 4 else 16

    if tm is None:
        tm = 512 if D <= 512 else 256   # small D => HBM-bound => bigger row tiles
    tm = max(min_tm, min(_round_up(tm, min_tm), _round_up(M, min_tm)))
    # Keep >= 2 row tiles when possible so both v7x TensorCores get work.
    if M > 2 * min_tm and pl.cdiv(M, tm) < 2:
        tm = _round_up(pl.cdiv(M, 2), min_tm)

    budget = int(_vmem_capacity_bytes() * 3 // 4)

    def _fits(tn_c, w_bufs):
        w = D * tn_c * mxu_isz * w_bufs               # resident weight block(s)
        xb = 2 * tm * D * x_isz                       # double-buffered x tiles
        ob = 2 * tm * tn_c * out_isz                  # double-buffered out tiles
        sc = tm * D * mxu_isz if tn_c < D else 0      # LN cache scratch
        bias = 2 * tn_c * 4
        return w + xb + ob + sc + bias <= budget

    if tn is None:
        if _fits(D, 1):
            tn = D                                    # whole W' resident (single-buffered)
        else:
            tn = None
            # Prefer multiples of 256 (v6e/v7x MXU is 256x256); 128 only as a last resort.
            for cand in (2048, 1024, 512, 256, 128):
                if D % cand == 0 and _fits(cand, 2):
                    tn = cand
                    break
            if tn is None:
                tn = 128 if D % 128 == 0 else D
    assert tn == D or (D % tn == 0 and tn % 128 == 0), "bad column tile"
    return tm, tn


def resblock_forward(x, w_fused, b_fused, *, tm=None, tn=None):
    """ResBlock forward: out = Linear(LayerNorm(x)), using params from fold_resblock_params.

    x: (B, S, D) with D = obs_dim on the last axis (the axis nn.LayerNorm(obs_dim)
    normalizes).  Rows (B*S) are tiled on grid axis 0, output columns on grid axis 1.
    """
    B, S, D = x.shape
    M = B * S
    x2 = x.reshape(M, D)  # metadata-only reshape; no padding, no extra HBM pass

    mxu_dtype = w_fused.dtype
    x_isz = jnp.dtype(x.dtype).itemsize
    o_isz = x_isz
    w_isz = jnp.dtype(mxu_dtype).itemsize

    tm, tn = _choose_tiles(M, D, x_isz, o_isz, w_isz, tm, tn)
    grid_m = pl.cdiv(M, tm)       # ragged last row tile handled by Pallas edge masking
    grid_n = pl.cdiv(D, tn)

    # W'/b' block index is constant over the whole grid when tn == D.
    weight_resident = grid_n == 1
    # Single-buffer them only when the saving is meaningful (> 2 MiB of VMEM).
    single_buf = weight_resident and (D * tn * w_isz > (2 << 20))

    in_specs = [
        pl.BlockSpec((tm, D), lambda i, j: (i, 0)),                                # x rows
        _block_spec((D, tn), lambda i, j: (0, j), single_buffer=single_buf),       # W'
        _block_spec((1, tn), lambda i, j: (0, j), single_buffer=single_buf),       # b'
    ]
    out_spec = pl.BlockSpec((tm, tn), lambda i, j: (i, j))

    if weight_resident:
        kernel = _resblock_kernel_fused
        scratch_shapes = []
    else:
        kernel = _resblock_kernel_cached
        scratch_shapes = [pltpu.VMEM((tm, D), mxu_dtype)]   # LN cache, reused over j

    # Generation-aware scoped-VMEM request: enough for our buffers, below physical.
    need = (D * tn * w_isz * (1 if single_buf else 2)
            + 2 * tm * D * x_isz
            + 2 * tm * tn * o_isz
            + (0 if weight_resident else tm * D * w_isz)
            + 2 * tn * 4
            + (1 << 20))
    vmem_limit = int(min(_vmem_capacity_bytes() * 9 // 10,
                         max(32 << 20, need * 3 // 2)))

    cost = pl.CostEstimate(
        flops=2 * M * D * D,
        transcendentals=M,  # one rsqrt per row
        bytes_accessed=M * D * x_isz + D * D * w_isz + M * D * o_isz + D * 4,
    )

    out = pl.pallas_call(
        kernel,
        out_shape=jax.ShapeDtypeStruct((M, D), x.dtype),
        grid_spec=pltpu.PrefetchScalarGridSpec(
            num_scalar_prefetch=0,
            grid=(grid_m, grid_n),
            in_specs=in_specs,
            out_specs=out_spec,
            scratch_shapes=scratch_shapes,
        ),
        compiler_params=pltpu.CompilerParams(
            dimension_semantics=("parallel", "arbitrary"),
            vmem_limit_bytes=vmem_limit,
        ),
        cost_estimate=cost,
    )(x2, w_fused, b_fused)

    return out.reshape(B, S, D)


def resblock_reference(x, gamma, beta, w_t, b):
    """Pure-f32 reference: Linear(LayerNorm(x)), PyTorch semantics."""
    xf = x.astype(jnp.float32)
    mean = jnp.mean(xf, axis=-1, keepdims=True)
    var = jnp.mean((xf - mean) ** 2, axis=-1, keepdims=True)
    y = (xf - mean) * jax.lax.rsqrt(var + LN_EPS) * gamma + beta
    return (y @ w_t.astype(jnp.float32) + b).astype(x.dtype)


if __name__ == "__main__":
    # Small but lane-dense shapes: batch=2, seq=8, obs_dim=128.
    B, S, D = 2, 8, 128

    key = jax.random.PRNGKey(0)
    kx, kg, kb, kw, kbi = jax.random.split(key, 5)

    x = jax.random.normal(kx, (B, S, D), dtype=jnp.float32)
    gamma = 1.0 + 0.1 * jax.random.normal(kg, (D,), dtype=jnp.float32)
    beta = 0.1 * jax.random.normal(kb, (D,), dtype=jnp.float32)
    w_t = jax.random.normal(kw, (D, D), dtype=jnp.float32) / jnp.sqrt(D)  # Linear W^T
    b = 0.1 * jax.random.normal(kbi, (D,), dtype=jnp.float32)

    # One-time (init-time) parameter fold -- NOT part of the per-step forward path.
    w_fused, b_fused = jax.block_until_ready(fold_resblock_params(gamma, beta, w_t, b))

    fwd = jax.jit(resblock_forward)
    out = jax.block_until_ready(fwd(x, w_fused, b_fused))

    ref = resblock_reference(x, gamma, beta, w_t, b)
    assert out.shape == (B, S, D)
    # bf16 MXU inputs (f32 accumulation) vs pure-f32 reference -> loose tolerance.
    assert jnp.allclose(out, ref, atol=5e-2, rtol=5e-2), "mismatch vs reference"

    print("KERNEL_OK")
</pallas_src>

<mosaic_0001>
module attributes {stable_mosaic.version = 11 : i64} {
  func.func @_resblock_kernel_fused(%arg0: i32, %arg1: i32, %arg2: memref<16x128xf32, #tpu.memory_space<vmem>>, %arg3: memref<128x128xbf16, #tpu.memory_space<vmem>>, %arg4: memref<1x128xf32, #tpu.memory_space<vmem>>, %arg5: memref<16x128xf32, #tpu.memory_space<vmem>>) attributes {dimension_semantics = [#tpu.dimension_semantics<parallel>, #tpu.dimension_semantics<arbitrary>], iteration_bounds = array<i64: 1, 1>, scalar_prefetch = 0 : i64, scratch_operands = 0 : i64, tpu.core_type = #tpu.core_type<tc>, window_params = [{transform_indices = @transform_0, window_bounds = array<i64: 16, 128>}, {transform_indices = @transform_1, window_bounds = array<i64: 128, 128>}, {transform_indices = @transform_2, window_bounds = array<i64: 1, 128>}, {transform_indices = @transform_3, window_bounds = array<i64: 16, 128>}]} {
    %c0 = arith.constant 0 : index
    %c0_0 = arith.constant 0 : index
    %0 = vector.load %arg2[%c0, %c0_0] : memref<16x128xf32, #tpu.memory_space<vmem>>, vector<16x128xf32>
    %cst = arith.constant dense<0.000000e+00> : vector<16xf32>
    %1 = vector.multi_reduction <add>, %0, %cst [1] : vector<16x128xf32> to vector<16xf32>
    %2 = vector.shape_cast %1 : vector<16xf32> to vector<16x1xf32>
    %cst_1 = arith.constant 1.280000e+02 : f32
    %3 = vector.broadcast %cst_1 : f32 to vector<16x1xf32>
    %4 = arith.divf %2, %3 : vector<16x1xf32>
    %5 = vector.broadcast %4 : vector<16x1xf32> to vector<16x128xf32>
    %6 = arith.subf %0, %5 : vector<16x128xf32>
    %7 = arith.mulf %6, %6 : vector<16x128xf32>
    %cst_2 = arith.constant dense<0.000000e+00> : vector<16xf32>
    %8 = vector.multi_reduction <add>, %7, %cst_2 [1] : vector<16x128xf32> to vector<16xf32>
    %9 = vector.shape_cast %8 : vector<16xf32> to vector<16x1xf32>
    %cst_3 = arith.constant 1.280000e+02 : f32
    %10 = vector.broadcast %cst_3 : f32 to vector<16x1xf32>
    %11 = arith.divf %9, %10 : vector<16x1xf32>
    %cst_4 = arith.constant 9.99999974E-6 : f32
    %12 = vector.broadcast %cst_4 : f32 to vector<16x1xf32>
    %13 = arith.addf %11, %12 : vector<16x1xf32>
    %14 = math.rsqrt %13 : vector<16x1xf32>
    %15 = vector.broadcast %14 : vector<16x1xf32> to vector<16x128xf32>
    %16 = arith.mulf %6, %15 : vector<16x128xf32>
    %17 = arith.truncf %16 : vector<16x128xf32> to vector<16x128xbf16>
    %c0_5 = arith.constant 0 : index
    %c0_6 = arith.constant 0 : index
    %18 = vector.load %arg3[%c0_5, %c0_6] : memref<128x128xbf16, #tpu.memory_space<vmem>>, vector<128x128xbf16>
    %cst_7 = arith.constant dense<0.000000e+00> : vector<16x128xf32>
    %19 = tpu.matmul %17, %18, %cst_7 {dimension_numbers = #tpu.dot_dimension_numbers<[1], [0], [0], [1], [0, 0, 1, 1], [], []>} : vector<16x128xbf16>, vector<128x128xbf16>, vector<16x128xf32> -> vector<16x128xf32>
    %c0_8 = arith.constant 0 : index
    %c0_9 = arith.constant 0 : index
    %20 = vector.load %arg4[%c0_8, %c0_9] : memref<1x128xf32, #tpu.memory_space<vmem>>, vector<1x128xf32>
    %21 = vector.broadcast %20 : vector<1x128xf32> to vector<16x128xf32>
    %22 = arith.addf %19, %21 : vector<16x128xf32>
    %c0_10 = arith.constant 0 : index
    %c0_11 = arith.constant 0 : index
    %23 = vector.load %arg5[%c0_10, %c0_11] : memref<16x128xf32, #tpu.memory_space<vmem>>, vector<16x128xf32>
    tpu.vector_store %arg5[%c0_10, %c0_11], %22 {strides = array<i32>} : memref<16x128xf32, #tpu.memory_space<vmem>>, vector<16x128xf32>,
    return
  }
  func.func @transform_0(%arg0: i32, %arg1: i32) -> (i32, i32) {
    %c0_i32 = arith.constant 0 : i32
    %c0_i32_0 = arith.constant 0 : i32
    return %arg0, %c0_i32 : i32, i32
  }
  func.func @transform_1(%arg0: i32, %arg1: i32) -> (i32, i32) {
    %c0_i32 = arith.constant 0 : i32
    %c0_i32_0 = arith.constant 0 : i32
    return %c0_i32, %arg1 : i32, i32
  }
  func.func @transform_2(%arg0: i32, %arg1: i32) -> (i32, i32) {
    %c0_i32 = arith.constant 0 : i32
    %c0_i32_0 = arith.constant 0 : i32
    return %c0_i32, %arg1 : i32, i32
  }
  func.func @transform_3(%arg0: i32, %arg1: i32) -> (i32, i32) {
    %c0_i32 = arith.constant 0 : i32
    return %arg0, %arg1 : i32, i32
  }
}

</mosaic_0001>

<llo_original>
// kernel: resblock_forward.1
$region0: #{resblock_forward.1}
  #allocation0 [shape = 'u32[]', space=smem, size = 0x4, offset = 0x4, fixed_abs, tag = 'smem constant byte address 0x4 - core index']
  #allocation1 [shape = 'u32[72,128]{1,0:T(1,128)}', space=vmem, size = 0x9000, scoped, tag = 'internal scratch']
  %s0 = inlined_call_operand.hbm [shape: f32[16,128], index: 0, kind: input, shape index: {}]
  %s1 = inlined_call_operand.hbm [shape: bf16[128,128], index: 1, kind: input, shape index: {}]
  %s2 = inlined_call_operand.vmem [shape: f32[1,128], index: 2, kind: input, shape index: {}]
  %s3 = inlined_call_operand.hbm [shape: f32[16,128], index: 3, kind: output, shape index: {}]
  %s4 = sld [smem:[#allocation0]]
  $region30: #{resblock_forward.1} parent=0
    _
  %s6 = ssub.s32 1, %s4
  %s7 = scalar_select 0, %s6, %s4
  $region1: #{resblock_forward.1} parent=0
    #allocation2 [shape = 'u8[8192]{0}', space=vmem, size = 0x2000, scoped, tag = 'input window, operand 0, single buffered']
    #allocation3 [shape = 's32[1]{0}', space=sflag, size = 0x4, scoped, tag = 'scoped memory for resblock_forward.1']
    #allocation4 [shape = 's32[1]{0}', space=sflag, size = 0x4, scoped, tag = 'scoped memory for resblock_forward.1']
    #allocation5 [shape = 'u8[32768]{0}', space=vmem, size = 0x8000, scoped, tag = 'input window, operand 1, single buffered']
    #allocation6 [shape = 's32[1]{0}', space=sflag, size = 0x4, scoped, tag = 'scoped memory for resblock_forward.1']
    #allocation7 [shape = 'u8[8192]{0}', space=vmem, size = 0x2000, scoped, tag = 'output window, operand 0, single buffered']
    %8 = vsyncpa [#allocation3], 0
    %9 = vsyncpa [#allocation6], 0
    %10 = vsyncpa [#allocation4], 0
    // Predicated region
    $region2: #{resblock_forward.1} parent=1 // pred_check
      _
    $region3: #{resblock_forward.1} parent=1 // pred_check_branch
      %12 = sbr.rel (0) target = $region5
    $region4: #{resblock_forward.1} parent=1 // pred_region
      %14 = vsyncadd [#allocation3], 0
      %s15 = sshll.u32 %s0, 4
      %s16 = int_to_ptr.hbm [resolvable:$true] %s15
      %s17 = sshll.u32 [#allocation2], 4
      %s18 = int_to_ptr.vmem [resolvable:$true] %s17
      %23 = dma.hbm_to_vmem [thread:$0]  %s16, 256, %s18, [#allocation3], 128, 128, 8
    $region5: #{resblock_forward.1} parent=1 // pred_fallthru
      _
    // Predicated region
    $region6: #{resblock_forward.1} parent=1 // pred_check
      _
    $region7: #{resblock_forward.1} parent=1 // pred_check_branch
      %25 = sbr.rel (0) target = $region9
    $region8: #{resblock_forward.1} parent=1 // pred_region
      %27 = vsyncadd [#allocation6], 0
      %s28 = sshll.u32 %s1, 4
      %s29 = int_to_ptr.hbm [resolvable:$true] %s28
      %s30 = sshll.u32 [#allocation5], 4
      %s31 = int_to_ptr.vmem [resolvable:$true] %s30
      %36 = dma.hbm_to_vmem [thread:$0]  %s29, 1024, %s31, [#allocation6], 64, 64, 4
    $region9: #{resblock_forward.1} parent=1 // pred_fallthru
      _
    // Predicated region
    $region10: #{resblock_forward.1} parent=1 // pred_check
      _
    $region11: #{resblock_forward.1} parent=1 // pred_check_branch
      %38 = sbr.rel (0) target = $region13
    $region12: #{resblock_forward.1} parent=1 // pred_region
      _
    $region13: #{resblock_forward.1} parent=1 // pred_fallthru
      _
    // Predicated region
    $region14: #{resblock_forward.1} parent=1 // pred_check
      _
    $region15: #{resblock_forward.1} parent=1 // pred_check_branch
      %40 = sbr.rel (0) target = $region17
    $region16: #{resblock_forward.1} parent=1 // pred_region
      %42 = dma.done [#allocation3], 256
    $region17: #{resblock_forward.1} parent=1 // pred_fallthru
      _
    // Predicated region
    $region18: #{resblock_forward.1} parent=1 // pred_check
      _
    $region19: #{resblock_forward.1} parent=1 // pred_check_branch
      %44 = sbr.rel (0) target = $region21
    $region20: #{resblock_forward.1} parent=1 // pred_region
      %46 = dma.done [#allocation6], 1024
    $region21: #{resblock_forward.1} parent=1 // pred_fallthru
      _
    %v47 = vld [vmem:[#allocation2] sm:$0xff]
    %v48 = vld [vmem:[#allocation2 + $0x8] sm:$0xff]
    %49 = vadd.xlane.f32.xlu0 %v47
    %v50 = vpop.xlane.xlu0 %49
    %51 = vadd.xlane.f32.xlu0 %v48
    %v52 = vpop.xlane.xlu0 %51
    %v53 = vrcp.pop 128.0
    %v54 = vmul.f32 128.0, %v53
    %v55 = vsub.f32 1.0, %v54
    %v56 = vmul.f32 %v53, %v55
    %v57 = vadd.f32 %v53, %v56
    %vm58 = vweird.f32 %v53
    %v59 = vsel %vm58, %v53, %v57
    %v60 = vmul.f32 %v50, %v59
    %v61 = vmul.f32 %v52, %v59
    %v62 = vsub.f32 %v47, %v60
    %v63 = vsub.f32 %v48, %v61
    %v64 = vmul.f32 %v62, %v62
    %v65 = vmul.f32 %v63, %v63
    %66 = vadd.xlane.f32.xlu0 %v64
    %v67 = vpop.xlane.xlu0 %66
    %68 = vadd.xlane.f32.xlu0 %v65
    %v69 = vpop.xlane.xlu0 %68
    %v70 = vmul.f32 %v67, %v59
    %v71 = vmul.f32 %v69, %v59
    %v72 = vadd.f32 %v70, 1e-05
    %v73 = vadd.f32 %v71, 1e-05
    %v74 = vrsqrt.pop %v72
    %v75 = vmul.f32 %v74, %v72
    %v76 = vmul.f32 %v75, %v74
    %v77 = vmul.f32 0.5, %v76
    %v78 = vsub.f32 1.5, %v77
    %v79 = vmul.f32 %v74, %v78
    %vm80 = vweird.f32 %v72
    %vm81 = vweird.f32 %v74
    %vm82 = vmor %vm80, %vm81
    %v83 = vsel %vm82, %v74, %v79
    %v84 = vrsqrt.pop %v73
    %v85 = vmul.f32 %v84, %v73
    %v86 = vmul.f32 %v85, %v84
    %v87 = vmul.f32 0.5, %v86
    %v88 = vsub.f32 1.5, %v87
    %v89 = vmul.f32 %v84, %v88
    %vm90 = vweird.f32 %v73
    %vm91 = vweird.f32 %v84
    %vm92 = vmor %vm90, %vm91
    %v93 = vsel %vm92, %v84, %v89
    %v94 = vmul.f32 %v62, %v83
    %v95 = vmul.f32 %v63, %v93
    %v96 = vpack.c.bf16 %v95, %v94
    %v97 = vld [vmem:[#allocation5] sm:$0xf]
    %v98 = vld [vmem:[#allocation5 + $0x4] sm:$0xf]
    %v99 = vld [vmem:[#allocation5 + $0x8] sm:$0xf]
    %v100 = vld [vmem:[#allocation5 + $0xc] sm:$0xf]
    %v101 = vld [vmem:[#allocation5 + $0x10] sm:$0xf]
    %v102 = vld [vmem:[#allocation5 + $0x14] sm:$0xf]
    %v103 = vld [vmem:[#allocation5 + $0x18] sm:$0xf]
    %v104 = vld [vmem:[#allocation5 + $0x1c] sm:$0xf]
    %v105 = vld [vmem:[#allocation5 + $0x20] sm:$0xf]
    %v106 = vld [vmem:[#allocation5 + $0x24] sm:$0xf]
    %v107 = vld [vmem:[#allocation5 + $0x28] sm:$0xf]
    %v108 = vld [vmem:[#allocation5 + $0x2c] sm:$0xf]
    %v109 = vld [vmem:[#allocation5 + $0x30] sm:$0xf]
    %v110 = vld [vmem:[#allocation5 + $0x34] sm:$0xf]
    %v111 = vld [vmem:[#allocation5 + $0x38] sm:$0xf]
    %v112 = vld [vmem:[#allocation5 + $0x3c] sm:$0xf]
    %v113 = vld [vmem:[%s2] sm:$0x1]
    %v115 = vperm.slane %v113, 0
    %v133 = vunpack.c.l.b16 %v97
    %v134 = vunpack.c.l.b16 %v98
    %v135 = vunpack.c.l.b16 %v99
    %v136 = vunpack.c.l.b16 %v100
    %v137 = vunpack.c.l.b16 %v101
    %v138 = vunpack.c.l.b16 %v102
    %v139 = vunpack.c.l.b16 %v103
    %v140 = vunpack.c.l.b16 %v104
    %v141 = vunpack.c.l.b16 %v105
    %v142 = vunpack.c.l.b16 %v106
    %v143 = vunpack.c.l.b16 %v107
    %v144 = vunpack.c.l.b16 %v108
    %v145 = vunpack.c.l.b16 %v109
    %v146 = vunpack.c.l.b16 %v110
    %v147 = vunpack.c.l.b16 %v111
    %v148 = vunpack.c.l.b16 %v112
    %v149 = vpack.c.b16 %v134, %v133
    %v150 = vpack.c.b16 %v136, %v135
    %v151 = vpack.c.b16 %v138, %v137
    %v152 = vpack.c.b16 %v140, %v139
    %v153 = vpack.c.b16 %v142, %v141
    %v154 = vpack.c.b16 %v144, %v143
    %v155 = vpack.c.b16 %v146, %v145
    %v156 = vpack.c.b16 %v148, %v147
    %165 = vmatpush.bf16.msra.mxu0 %v156
    %166 = vmatpush.bf16.msra.mxu0 %v155
    %167 = vmatpush.bf16.msra.mxu0 %v154
    %168 = vmatpush.bf16.msra.mxu0 %v153
    %169 = vmatpush.bf16.msra.mxu0 %v152
    %170 = vmatpush.bf16.msra.mxu0 %v151
    %171 = vmatpush.bf16.msra.mxu0 %v150
    %172 = vmatpush.bf16.msra.mxu0 %v149
    %173 = vmatmul.bf16.gmra.mxu0 %v96
    %v174 = vpop.f32.mrf.mxu0
    %v175 = vadd.f32 %v115, %v174
    %v176 = vpop.f32.mrf.mxu0
    %v177 = vadd.f32 %v115, %v176
    %178 = vdwg.mxu0
    %179 = vst [vmem:[#allocation7] sm:$0xff] %v175
    %180 = vst [vmem:[#allocation7 + $0x8] sm:$0xff] %v177
    // Predicated region
    $region22: #{resblock_forward.1} parent=1 // pred_check
      _
    $region23: #{resblock_forward.1} parent=1 // pred_check_branch
      %182 = sbr.rel (0) target = $region25
    $region24: #{resblock_forward.1} parent=1 // pred_region
      %184 = vsyncadd [#allocation4], 0
      %s185 = sshll.u32 [#allocation7], 4
      %s186 = int_to_ptr.vmem [resolvable:$true] %s185
      %s187 = sshll.u32 %s3, 4
      %s188 = int_to_ptr.hbm [resolvable:$true] %s187
      %193 = dma.vmem_to_hbm [thread:$0]  %s186, 256, %s188, [#allocation4], 128, 128, 8
    $region25: #{resblock_forward.1} parent=1 // pred_fallthru
      _
    // Predicated region
    $region26: #{resblock_forward.1} parent=1 // pred_check
      _
    $region27: #{resblock_forward.1} parent=1 // pred_check_branch
      %195 = sbr.rel (0) target = $region29
    $region28: #{resblock_forward.1} parent=1 // pred_region
      %197 = dma.done [#allocation4], 256
    $region29: #{resblock_forward.1} parent=1 // pred_fallthru
      _
    %198 = vsyncpa [#allocation3], 1
    %199 = vsyncpa [#allocation6], 1
    %200 = vsyncpa [#allocation4], 1

</llo_original>
